<compile_context>
chip_gen: v7x
topology: tpu7x:2x2x1
jax: 0.10.0
libtpu: 0.0.40
codegen_flags: <defaults>
</compile_context>

<pallas_src>
import math
import numpy as np
import jax
import jax.numpy as jnp
from jax import lax
from jax.experimental import pallas as pl
from jax.experimental.pallas import tpu as pltpu


def _embedding_kernel(ids_ref,      # SMEM (B, S) int32  (scalar prefetch)
                      emb_hbm,      # ANY/HBM (V, E) f32  (raw ref, manual DMA)
                      w_ref,        # VMEM (E, D)
                      b_ref,        # VMEM (1, D)
                      pe_ref,       # VMEM (TS, D)
                      gamma_ref,    # VMEM (1, D)
                      beta_ref,     # VMEM (1, D)
                      o_ref,        # VMEM (TS, D)
                      xbuf,         # VMEM scratch (TS, E)
                      sem):         # DMA semaphore (1,)
    TS, _E = xbuf.shape
    D = o_ref.shape[-1]
    b = pl.program_id(0)
    st = pl.program_id(1)
    s0 = st * TS

    # ---- Fused token-embedding gather: one table-row DMA per token of this tile ----
    @pl.loop(0, TS)
    def _start(r):
        tok = ids_ref[b, s0 + r]
        pltpu.make_async_copy(
            emb_hbm.at[pl.ds(tok, 1), :], xbuf.at[pl.ds(r, 1), :], sem.at[0]
        ).start()

    @pl.loop(0, TS)
    def _wait(r):
        pltpu.make_async_copy(
            emb_hbm.at[pl.ds(0, 1), :], xbuf.at[pl.ds(r, 1), :], sem.at[0]
        ).wait()

    x = xbuf[...]                                           # (TS, E) f32

    # Linear (MXU) + bias.
    h = jnp.dot(x, w_ref[...], preferred_element_type=jnp.float32) + b_ref[...]

    # Exact (erf) GELU — matches torch.nn.functional.gelu default.
    h = 0.5 * h * (1.0 + lax.erf(h * (1.0 / math.sqrt(2.0))))

    # Dropout: eval-mode identity.

    # Add positional embedding.
    z = h + pe_ref[...]

    # Single-pass LayerNorm over last dim, eps=1e-12 (biased variance, as in torch).
    inv_d = 1.0 / D
    s1 = jnp.sum(z, axis=-1, keepdims=True)
    s2 = jnp.sum(z * z, axis=-1, keepdims=True)
    mean = s1 * inv_d
    var = s2 * inv_d - mean * mean
    zn = (z - mean) * lax.rsqrt(var + 1e-12)

    o_ref[...] = zn * gamma_ref[...] + beta_ref[...]


def _pick_seq_tile(S, max_tile=256):
    for ts in (max_tile, 256, 128, 64, 32, 16, 8):
        if ts <= S and S % ts == 0 and ts % 8 == 0:
            return ts
    return S


def transformer_embedding_fwd(sequence, emb_table, w, b, pe, gamma, beta, *, seq_tile=None):
    """sequence: (B, S) int32.  Returns (B, S, D) float32."""
    B, S = sequence.shape
    V, E = emb_table.shape
    D = w.shape[1]
    assert S <= pe.shape[0], "sequence length exceeds positional-embedding max_len"

    TS = seq_tile if seq_tile is not None else _pick_seq_tile(S)
    assert S % TS == 0, "sequence length must be divisible by the sequence tile"

    # Clamp ids so a bad token id can never drive an out-of-bounds HBM DMA.
    # (torch.nn.Embedding would raise; jnp.take clamps — we match the latter.)
    ids = jnp.clip(sequence.astype(jnp.int32), 0, V - 1)

    pe_s = pe[:S, :]                                        # (S, D)
    b2 = b.reshape(1, D)
    g2 = gamma.reshape(1, D)
    be2 = beta.reshape(1, D)

    grid = (B, S // TS)

    # NOTE: W / bias / gamma / beta / pe-tiles with constant block indices are never
    # re-fetched across grid steps; at realistic sizes they could additionally be
    # single-buffered (pipeline_mode) to free VMEM on v7x.
    grid_spec = pltpu.PrefetchScalarGridSpec(
        num_scalar_prefetch=1,
        grid=grid,
        in_specs=[
            pl.BlockSpec(memory_space=pl.ANY),                       # emb table stays in HBM
            pl.BlockSpec((E, D), lambda bi, si, ids: (0, 0)),        # W (resident)
            pl.BlockSpec((1, D), lambda bi, si, ids: (0, 0)),        # bias
            pl.BlockSpec((TS, D), lambda bi, si, ids: (si, 0)),      # positional slab
            pl.BlockSpec((1, D), lambda bi, si, ids: (0, 0)),        # LN gamma
            pl.BlockSpec((1, D), lambda bi, si, ids: (0, 0)),        # LN beta
        ],
        out_specs=pl.BlockSpec((None, TS, D), lambda bi, si, ids: (bi, si, 0)),
        scratch_shapes=[
            pltpu.VMEM((TS, E), jnp.float32),                        # gathered rows
            pltpu.SemaphoreType.DMA((1,)),                           # shared gather semaphore
        ],
    )

    cost = pl.CostEstimate(
        flops=2 * B * S * E * D + 10 * B * S * D,
        transcendentals=2 * B * S * D,                               # erf + rsqrt
        bytes_accessed=4 * (B * S * E + E * D + S * D + 3 * D + B * S * D + B * S),
    )

    return pl.pallas_call(
        _embedding_kernel,
        out_shape=jax.ShapeDtypeStruct((B, S, D), jnp.float32),
        grid_spec=grid_spec,
        compiler_params=pltpu.CompilerParams(
            dimension_semantics=("parallel", "parallel"),
            vmem_limit_bytes=40 * 1024 * 1024,                       # safe on v5e/v6e/v7x
        ),
        cost_estimate=cost,
    )(ids, emb_table, w, b2, pe_s, g2, be2)


def make_positional_embedding(d_model, max_len=512):
    pe = np.zeros((max_len, d_model), dtype=np.float32)
    position = np.arange(0, max_len, dtype=np.float32)[:, None]
    div_term = np.exp(np.arange(0, d_model, 2, dtype=np.float32)
                      * -(math.log(10000.0) / d_model))
    pe[:, 0::2] = np.sin(position * div_term)
    pe[:, 1::2] = np.cos(position * div_term)
    return jnp.asarray(pe)                                   # (max_len, d_model)


def reference_fwd(sequence, emb_table, w, b, pe, gamma, beta):
    S = sequence.shape[1]
    x = jnp.take(emb_table, sequence, axis=0)
    h = jnp.dot(x, w) + b
    h = jax.nn.gelu(h, approximate=False)
    z = h + pe[:S, :][None, :, :]
    mean = jnp.mean(z, axis=-1, keepdims=True)
    var = jnp.mean((z - mean) ** 2, axis=-1, keepdims=True)
    zn = (z - mean) / jnp.sqrt(var + 1e-12)
    return zn * gamma + beta


if __name__ == "__main__":
    # Small but lane-dense, module-consistent shapes (E = D = 128).
    vocab_size = 64
    embed_size = 128
    d_model = 128
    pad_idx = 0
    max_len = 512
    B, S = 2, 128

    key = jax.random.PRNGKey(0)
    k_tok, k_emb, k_w, k_b = jax.random.split(key, 4)

    sequence = jax.random.randint(k_tok, (B, S), 0, vocab_size, dtype=jnp.int32)

    # nn.Embedding(vocab_size, embed_size, padding_idx=pad_idx): padding row is zero.
    emb_table = jax.random.normal(k_emb, (vocab_size, embed_size), dtype=jnp.float32)
    emb_table = emb_table.at[pad_idx].set(0.0)

    # nn.Linear(embed_size, d_model).
    w = jax.random.normal(k_w, (embed_size, d_model), dtype=jnp.float32) * 0.05
    b = jax.random.normal(k_b, (d_model,), dtype=jnp.float32) * 0.05

    # nn.LayerNorm(d_model) default init.
    gamma = jnp.ones((d_model,), dtype=jnp.float32)
    beta = jnp.zeros((d_model,), dtype=jnp.float32)

    pe = make_positional_embedding(d_model, max_len)

    out = transformer_embedding_fwd(sequence, emb_table, w, b, pe, gamma, beta, seq_tile=64)
    out = jax.block_until_ready(out)

    ref = reference_fwd(sequence, emb_table, w, b, pe, gamma, beta)
    if not np.allclose(np.asarray(out), np.asarray(ref), atol=1e-4, rtol=1e-4):
        raise AssertionError("Pallas kernel output does not match JAX reference")

    print("KERNEL_OK")
</pallas_src>

<mosaic_0001>
module attributes {stable_mosaic.version = 11 : i64} {
  func.func @_embedding_kernel(%arg0: i32, %arg1: i32, %arg2: memref<2x128xi32, #tpu.memory_space<smem>>, %arg3: memref<64x128xf32, #tpu.memory_space<any>>, %arg4: memref<128x128xf32, #tpu.memory_space<vmem>>, %arg5: memref<1x128xf32, #tpu.memory_space<vmem>>, %arg6: memref<64x128xf32, #tpu.memory_space<vmem>>, %arg7: memref<1x128xf32, #tpu.memory_space<vmem>>, %arg8: memref<1x128xf32, #tpu.memory_space<vmem>>, %arg9: memref<1x64x128xf32, #tpu.memory_space<vmem>>, %arg10: memref<64x128xf32, #tpu.memory_space<vmem>>, %arg11: memref<1x!tpu.dma_semaphore, #tpu.memory_space<semaphore_mem>>) attributes {dimension_semantics = [#tpu.dimension_semantics<parallel>, #tpu.dimension_semantics<parallel>], iteration_bounds = array<i64: 2, 2>, scalar_prefetch = 1 : i64, scratch_operands = 2 : i64, tpu.core_type = #tpu.core_type<tc>, window_params = [{}, {pipeline_mode = #tpu.pipeline_mode<synchronous>, transform_indices = @transform_1, window_bounds = array<i64: 128, 128>}, {pipeline_mode = #tpu.pipeline_mode<synchronous>, transform_indices = @transform_2, window_bounds = array<i64: 1, 128>}, {transform_indices = @transform_3, window_bounds = array<i64: 64, 128>}, {pipeline_mode = #tpu.pipeline_mode<synchronous>, transform_indices = @transform_4, window_bounds = array<i64: 1, 128>}, {pipeline_mode = #tpu.pipeline_mode<synchronous>, transform_indices = @transform_5, window_bounds = array<i64: 1, 128>}, {transform_indices = @transform_6, window_bounds = array<i64: 1, 64, 128>}]} {
    %c64_i32 = arith.constant 64 : i32
    %0 = arith.muli %arg1, %c64_i32 : i32
    %c0_i32 = arith.constant 0 : i32
    %c64_i32_0 = arith.constant 64 : i32
    %1 = arith.addi %c0_i32, %c64_i32_0 : i32
    %c1_i32 = arith.constant 1 : i32
    scf.for %arg12 = %c0_i32 to %1 step %c1_i32  : i32 {
      %c1_i32_28 = arith.constant 1 : i32
      %46 = arith.muli %arg12, %c1_i32_28 : i32
      %c0_i32_29 = arith.constant 0 : i32
      %47 = arith.addi %c0_i32_29, %46 : i32
      %48 = arith.addi %0, %47 : i32
      %49 = arith.index_cast %arg0 : i32 to index
      %50 = arith.index_cast %48 : i32 to index
      %51 = memref.load %arg2[%49, %50] : memref<2x128xi32, #tpu.memory_space<smem>>
      %c0_i32_30 = arith.constant 0 : i32
      %c0_i32_31 = arith.constant 0 : i32
      %52 = tpu.memref_slice %arg3[%51, %c0_i32_31] : memref<64x128xf32, #tpu.memory_space<any>> -> memref<1x128xf32, #tpu.memory_space<any>>
      %c0_i32_32 = arith.constant 0 : i32
      %53 = tpu.memref_slice %arg10[%47, %c0_i32_32] : memref<64x128xf32, #tpu.memory_space<vmem>> -> memref<1x128xf32, #tpu.memory_space<vmem>>
      %54 = tpu.memref_slice %arg11[%c0_i32_30] : memref<1x!tpu.dma_semaphore, #tpu.memory_space<semaphore_mem>> -> memref<1x!tpu.dma_semaphore, #tpu.memory_space<semaphore_mem>>
      %55 = tpu.memref_squeeze %54 : memref<1x!tpu.dma_semaphore, #tpu.memory_space<semaphore_mem>> -> memref<!tpu.dma_semaphore, #tpu.memory_space<semaphore_mem>>
      tpu.enqueue_dma source(%52 : memref<1x128xf32, #tpu.memory_space<any>>) target(%53 : memref<1x128xf32, #tpu.memory_space<vmem>>) target_semaphore(%55 : memref<!tpu.dma_semaphore, #tpu.memory_space<semaphore_mem>>)
    }
    %c64_i32_1 = arith.constant 64 : i32
    %c0_i32_2 = arith.constant 0 : i32
    %c64_i32_3 = arith.constant 64 : i32
    %2 = arith.addi %c0_i32_2, %c64_i32_3 : i32
    %c1_i32_4 = arith.constant 1 : i32
    scf.for %arg12 = %c0_i32_2 to %2 step %c1_i32_4  : i32 {
      %c1_i32_28 = arith.constant 1 : i32
      %46 = arith.muli %arg12, %c1_i32_28 : i32
      %c0_i32_29 = arith.constant 0 : i32
      %47 = arith.addi %c0_i32_29, %46 : i32
      %c0_i32_30 = arith.constant 0 : i32
      %c0_i32_31 = arith.constant 0 : i32
      %c0_i32_32 = arith.constant 0 : i32
      %48 = tpu.memref_slice %arg3[%c0_i32_31, %c0_i32_32] : memref<64x128xf32, #tpu.memory_space<any>> -> memref<1x128xf32, #tpu.memory_space<any>>
      %c0_i32_33 = arith.constant 0 : i32
      %49 = tpu.memref_slice %arg10[%47, %c0_i32_33] : memref<64x128xf32, #tpu.memory_space<vmem>> -> memref<1x128xf32, #tpu.memory_space<vmem>>
      %50 = tpu.memref_slice %arg11[%c0_i32_30] : memref<1x!tpu.dma_semaphore, #tpu.memory_space<semaphore_mem>> -> memref<1x!tpu.dma_semaphore, #tpu.memory_space<semaphore_mem>>
      %51 = tpu.memref_squeeze %50 : memref<1x!tpu.dma_semaphore, #tpu.memory_space<semaphore_mem>> -> memref<!tpu.dma_semaphore, #tpu.memory_space<semaphore_mem>>
      tpu.wait_dma2 semaphore(%51 : memref<!tpu.dma_semaphore, #tpu.memory_space<semaphore_mem>>) src(%48 : memref<1x128xf32, #tpu.memory_space<any>>) dst(%49 : memref<1x128xf32, #tpu.memory_space<vmem>>)
    }
    %c64_i32_5 = arith.constant 64 : i32
    %c0 = arith.constant 0 : index
    %c0_6 = arith.constant 0 : index
    %3 = vector.load %arg10[%c0, %c0_6] : memref<64x128xf32, #tpu.memory_space<vmem>>, vector<64x128xf32>
    %c0_7 = arith.constant 0 : index
    %c0_8 = arith.constant 0 : index
    %4 = vector.load %arg4[%c0_7, %c0_8] : memref<128x128xf32, #tpu.memory_space<vmem>>, vector<128x128xf32>
    %cst = arith.constant dense<0.000000e+00> : vector<64x128xf32>
    %5 = tpu.matmul %3, %4, %cst {dimension_numbers = #tpu.dot_dimension_numbers<[1], [0], [0], [1], [0, 0, 1, 1], [], []>} : vector<64x128xf32>, vector<128x128xf32>, vector<64x128xf32> -> vector<64x128xf32>
    %c0_9 = arith.constant 0 : index
    %c0_10 = arith.constant 0 : index
    %6 = vector.load %arg5[%c0_9, %c0_10] : memref<1x128xf32, #tpu.memory_space<vmem>>, vector<1x128xf32>
    %7 = vector.broadcast %6 : vector<1x128xf32> to vector<64x128xf32>
    %8 = arith.addf %5, %7 : vector<64x128xf32>
    %cst_11 = arith.constant 5.000000e-01 : f32
    %9 = vector.broadcast %cst_11 : f32 to vector<64x128xf32>
    %10 = arith.mulf %9, %8 : vector<64x128xf32>
    %cst_12 = arith.constant 0.707106769 : f32
    %11 = vector.broadcast %cst_12 : f32 to vector<64x128xf32>
    %12 = arith.mulf %8, %11 : vector<64x128xf32>
    %13 = math.erf %12 : vector<64x128xf32>
    %cst_13 = arith.constant 1.000000e+00 : f32
    %14 = vector.broadcast %cst_13 : f32 to vector<64x128xf32>
    %15 = arith.addf %14, %13 : vector<64x128xf32>
    %16 = arith.mulf %10, %15 : vector<64x128xf32>
    %c0_14 = arith.constant 0 : index
    %c0_15 = arith.constant 0 : index
    %17 = vector.load %arg6[%c0_14, %c0_15] : memref<64x128xf32, #tpu.memory_space<vmem>>, vector<64x128xf32>
    %18 = arith.addf %16, %17 : vector<64x128xf32>
    %cst_16 = arith.constant dense<0.000000e+00> : vector<64xf32>
    %19 = vector.multi_reduction <add>, %18, %cst_16 [1] : vector<64x128xf32> to vector<64xf32>
    %20 = vector.shape_cast %19 : vector<64xf32> to vector<64x1xf32>
    %21 = arith.mulf %18, %18 : vector<64x128xf32>
    %cst_17 = arith.constant dense<0.000000e+00> : vector<64xf32>
    %22 = vector.multi_reduction <add>, %21, %cst_17 [1] : vector<64x128xf32> to vector<64xf32>
    %23 = vector.shape_cast %22 : vector<64xf32> to vector<64x1xf32>
    %cst_18 = arith.constant 7.812500e-03 : f32
    %24 = vector.broadcast %cst_18 : f32 to vector<64x1xf32>
    %25 = arith.mulf %20, %24 : vector<64x1xf32>
    %cst_19 = arith.constant 7.812500e-03 : f32
    %26 = vector.broadcast %cst_19 : f32 to vector<64x1xf32>
    %27 = arith.mulf %23, %26 : vector<64x1xf32>
    %28 = arith.mulf %25, %25 : vector<64x1xf32>
    %29 = arith.subf %27, %28 : vector<64x1xf32>
    %30 = vector.broadcast %25 : vector<64x1xf32> to vector<64x128xf32>
    %31 = arith.subf %18, %30 : vector<64x128xf32>
    %cst_20 = arith.constant 9.99999996E-13 : f32
    %32 = vector.broadcast %cst_20 : f32 to vector<64x1xf32>
    %33 = arith.addf %29, %32 : vector<64x1xf32>
    %34 = math.rsqrt %33 : vector<64x1xf32>
    %35 = vector.broadcast %34 : vector<64x1xf32> to vector<64x128xf32>
    %36 = arith.mulf %31, %35 : vector<64x128xf32>
    %c0_21 = arith.constant 0 : index
    %c0_22 = arith.constant 0 : index
    %37 = vector.load %arg7[%c0_21, %c0_22] : memref<1x128xf32, #tpu.memory_space<vmem>>, vector<1x128xf32>
    %38 = vector.broadcast %37 : vector<1x128xf32> to vector<64x128xf32>
    %39 = arith.mulf %36, %38 : vector<64x128xf32>
    %c0_23 = arith.constant 0 : index
    %c0_24 = arith.constant 0 : index
    %40 = vector.load %arg8[%c0_23, %c0_24] : memref<1x128xf32, #tpu.memory_space<vmem>>, vector<1x128xf32>
    %41 = vector.broadcast %40 : vector<1x128xf32> to vector<64x128xf32>
    %42 = arith.addf %39, %41 : vector<64x128xf32>
    %c0_25 = arith.constant 0 : index
    %c0_26 = arith.constant 0 : index
    %c0_27 = arith.constant 0 : index
    %43 = vector.load %arg9[%c0_25, %c0_26, %c0_27] : memref<1x64x128xf32, #tpu.memory_space<vmem>>, vector<1x64x128xf32>
    %44 = vector.shape_cast %43 : vector<1x64x128xf32> to vector<64x128xf32>
    %45 = vector.shape_cast %42 : vector<64x128xf32> to vector<1x64x128xf32>
    tpu.vector_store %arg9[%c0_25, %c0_26, %c0_27], %45 {strides = array<i32>} : memref<1x64x128xf32, #tpu.memory_space<vmem>>, vector<1x64x128xf32>,
    return
  }
  func.func @transform_1(%arg0: i32, %arg1: i32, %arg2: memref<2x128xi32, #tpu.memory_space<smem>>) -> (i32, i32) {
    %c0_i32 = arith.constant 0 : i32
    %c0_i32_0 = arith.constant 0 : i32
    %c0_i32_1 = arith.constant 0 : i32
    return %c0_i32, %c0_i32_0 : i32, i32
  }
  func.func @transform_2(%arg0: i32, %arg1: i32, %arg2: memref<2x128xi32, #tpu.memory_space<smem>>) -> (i32, i32) {
    %c0_i32 = arith.constant 0 : i32
    %c0_i32_0 = arith.constant 0 : i32
    %c0_i32_1 = arith.constant 0 : i32
    return %c0_i32, %c0_i32_0 : i32, i32
  }
  func.func @transform_3(%arg0: i32, %arg1: i32, %arg2: memref<2x128xi32, #tpu.memory_space<smem>>) -> (i32, i32) {
    %c0_i32 = arith.constant 0 : i32
    %c0_i32_0 = arith.constant 0 : i32
    return %arg1, %c0_i32 : i32, i32
  }
  func.func @transform_4(%arg0: i32, %arg1: i32, %arg2: memref<2x128xi32, #tpu.memory_space<smem>>) -> (i32, i32) {
    %c0_i32 = arith.constant 0 : i32
    %c0_i32_0 = arith.constant 0 : i32
    %c0_i32_1 = arith.constant 0 : i32
    return %c0_i32, %c0_i32_0 : i32, i32
  }
  func.func @transform_5(%arg0: i32, %arg1: i32, %arg2: memref<2x128xi32, #tpu.memory_space<smem>>) -> (i32, i32) {
    %c0_i32 = arith.constant 0 : i32
    %c0_i32_0 = arith.constant 0 : i32
    %c0_i32_1 = arith.constant 0 : i32
    return %c0_i32, %c0_i32_0 : i32, i32
  }
  func.func @transform_6(%arg0: i32, %arg1: i32, %arg2: memref<2x128xi32, #tpu.memory_space<smem>>) -> (i32, i32, i32) {
    %c0_i32 = arith.constant 0 : i32
    %c0_i32_0 = arith.constant 0 : i32
    return %arg0, %arg1, %c0_i32 : i32, i32, i32
  }
}

</mosaic_0001>

<llo_original>
// kernel: tpu_custom_call.1
$region0: #{tpu_custom_call.1}
  #allocation0 [shape = 'u32[]', space=smem, size = 0x4, offset = 0x4, fixed_abs, tag = 'smem constant byte address 0x4 - core index']
  #allocation1 [shape = 'u32[144,128]{1,0:T(1,128)}', space=vmem, size = 0x12000, scoped, tag = 'internal scratch']
  #allocation2 [shape = 'f32[64,128]{1,0:T(8,128)}', space=vmem, size = 0x8000, scoped, tag = 'scratch operand']
  #allocation3 [shape = 's32[1]{0}', space=sflag, size = 0x4, scoped, tag = 'scratch operand']
  #allocation4 [shape = 's32[1]{0}', space=sflag, size = 0x4, scoped, tag = 'scoped memory for tpu_custom_call.1']
  #allocation5 [shape = 'u8[1024]{0}', space=smem, size = 0x400, scoped, tag = 'prefetched SMEM operand 0']
  #allocation12 [shape = 's32[]', space=sflag, size = 0x4, offset = 0, fixed_abs, tag = 'sflag constant byte address 0x0 - dummy sync flag']
  #allocation13 [shape = 's32[]', space=sflag, size = 0x4, offset = 0, fixed_abs, tag = 'sflag constant byte address 0x0 - dummy sync flag']
  #allocation14 [shape = 'u32[]', space=smem, size = 0x4, offset = 0x44, fixed_abs, tag = 'smem constant byte address 0x44 - assertion arg 0']
  #allocation15 [shape = 'u32[]', space=smem, size = 0x4, offset = 0x48, fixed_abs, tag = 'smem constant byte address 0x48 - assertion arg 1']
  %s0 = inlined_call_operand.hbm [shape: s32[2,128], index: 0, kind: input, shape index: {}]
  %s1 = inlined_call_operand.hbm [shape: f32[64,128], index: 1, kind: input, shape index: {}]
  %s2 = inlined_call_operand.hbm [shape: f32[128,128], index: 2, kind: input, shape index: {}]
  %s3 = inlined_call_operand.vmem [shape: f32[1,128], index: 3, kind: input, shape index: {}]
  %s4 = inlined_call_operand.hbm [shape: f32[128,128], index: 4, kind: input, shape index: {}]
  %s5 = inlined_call_operand.vmem [shape: f32[1,128], index: 5, kind: input, shape index: {}]
  %s6 = inlined_call_operand.vmem [shape: f32[1,128], index: 6, kind: input, shape index: {}]
  %s7 = inlined_call_operand.hbm [shape: f32[2,128,128], index: 7, kind: output, shape index: {}]
  %s8 = sld [smem:[#allocation0]]
  $region79: #{tpu_custom_call.1} parent=0
    _
  %s10 = ssub.s32 1, %s8
  %s11 = scalar_select 0, %s10, %s8
  %13 = dma.hbm_to_smem %s0, 32, [#allocation5], [#allocation4]
  %14 = dma.done [#allocation4], 32
  %15 = sfence
  $region1: #{tpu_custom_call.1} parent=0
    #allocation6 [shape = 'u8[65536]{0}', space=vmem, size = 0x10000, scoped, tag = 'input window, operand 2, single buffered']
    #allocation7 [shape = 's32[2]{0}', space=sflag, size = 0x8, scoped, tag = 'scoped memory for tpu_custom_call.1']
    #allocation8 [shape = 's32[2]{0}', space=sflag, size = 0x8, scoped, tag = 'scoped memory for tpu_custom_call.1']
    #allocation9 [shape = 'u8[65536]{0}', space=vmem, size = 0x10000, scoped, tag = 'input window, operand 4']
    #allocation10 [shape = 's32[2]{0}', space=sflag, size = 0x8, scoped, tag = 'scoped memory for tpu_custom_call.1']
    #allocation11 [shape = 'u8[65536]{0}', space=vmem, size = 0x10000, scoped, tag = 'output window, operand 0']
    %16 = vsyncpa [#allocation7], 0
    %17 = vsyncpa [#allocation10], 0
    %s18 = scalar_lea.sflag [#allocation10], 1
    %19 = vsyncpa %s18, 0
    %20 = vsyncpa [#allocation8], 0
    %s21 = scalar_lea.sflag [#allocation8], 1
    %22 = vsyncpa %s21, 0
    loop: start=0, step=1, limit=6
    $region2: #{tpu_custom_call.1} parent=1 // loop_pre_header
      _
    $region3: #{tpu_custom_call.1} parent=1 // loop_header
      %s24 = sphi 0, %s28
      %p25 = scmp.ge.s32.totalorder %s24, 6
      %s31 = sphi 0, %s43
      %s32 = sphi 0, %s39
      %s33 = sphi 0, %s31
      %s34 = sphi 0, %s32
      %s35 = sphi 0, %s33
      %s36 = sphi 0, %s34
      %s44 = sphi 0, %s44
      %s46 = sphi 0, %s44
      %s47 = sphi 0, %s46
      %s61 = sphi 0, %s47
      %s65 = sphi 0, %s65
      %s67 = sphi 0, %s65
      %s68 = sphi 0, %s67
      %s82 = sphi 0, %s68
      %s88 = sphi 0, %s90
      %s91 = sphi 0, %s88
      %s92 = sphi 0, %s91
      %s108 = sphi 0, %s92
      %s112 = sphi 0, %s112
      %s114 = sphi 0, %s112
      %s115 = sphi 0, %s114
      %s129 = sphi 0, %s115
      %s133 = sphi 0, %s133
      %s135 = sphi 0, %s133
      %s136 = sphi 0, %s135
      %s150 = sphi 0, %s136
      %s158 = sphi 0, %s160
      %s161 = sphi 0, %s158
      %s162 = sphi 0, %s161
      %s178 = sphi 0, %s162
    $region4: #{tpu_custom_call.1} parent=1 // loop_header_branch
      %27 = sbr.rel (%p25) target = $region8
    $region5: #{tpu_custom_call.1} parent=1 // loop_body
      %s29 = ssub.s32 %s24, 1
      %s30 = ssub.s32 %s24, 2
      %s37 = sadd.s32 1, %s32
      %p38 = scmp.ge.s32.totalorder %s37, 2
      %s39 = scalar_select %p38, 0, %s37
      %s40 = sadd.s32 1, %s31
      %s41 = scalar_select %p38, %s40, %s31
      %p42 = scmp.ge.s32.totalorder %s41, 2
      %s43 = scalar_select %p42, 0, %s41
      %s45 = sadd.s32 %s44, 1
      %p48 = scmp.eq.s32.totalorder %s24, 3
      %p49 = scmp.ne.s32.totalorder %s44, %s46
      %p50 = scmp.eq.s32.totalorder %s24, 0
      %p51 = por %p49, %p50
      %p52 = scmp.ne.s32.totalorder %s44, %s46
      %p53 = scmp.eq.s32.totalorder %s29, 3
      %p54 = por %p52, %p53
      %p55 = scmp.ne.s32.totalorder %s46, %s47
      %p56 = scmp.eq.s32.totalorder %s29, 0
      %p57 = por %p55, %p56
      %p58 = scmp.ne.s32.totalorder %s46, %s47
      %p59 = scmp.eq.s32.totalorder %s30, 3
      %p60 = por %p58, %p59
      %p62 = scmp.ne.s32.totalorder %s47, %s61
      %p63 = scmp.eq.s32.totalorder %s30, 0
      %p64 = por %p62, %p63
      %s66 = sadd.s32 %s65, 1
      %p69 = scmp.eq.s32.totalorder %s24, 3
      %p70 = scmp.ne.s32.totalorder %s65, %s67
      %p71 = scmp.eq.s32.totalorder %s24, 0
      %p72 = por %p70, %p71
      %p73 = scmp.ne.s32.totalorder %s65, %s67
      %p74 = scmp.eq.s32.totalorder %s29, 3
      %p75 = por %p73, %p74
      %p76 = scmp.ne.s32.totalorder %s67, %s68
      %p77 = scmp.eq.s32.totalorder %s29, 0
      %p78 = por %p76, %p77
      %p79 = scmp.ne.s32.totalorder %s67, %s68
      %p80 = scmp.eq.s32.totalorder %s30, 3
      %p81 = por %p79, %p80
      %p83 = scmp.ne.s32.totalorder %s68, %s82
      %p84 = scmp.eq.s32.totalorder %s30, 0
      %p85 = por %p83, %p84
      %s86 = ssub.s32 %s32, %s39
      %p87 = scmp.eq.s32.totalorder %s86, 0
      %s89 = sadd.s32 %s88, 1
      %s90 = scalar_select %p87, %s88, %s89
      %p93 = pneg %p87
      %p94 = scmp.eq.s32.totalorder %s24, 3
      %p95 = por %p93, %p94
      %p96 = scmp.ne.s32.totalorder %s88, %s91
      %p97 = scmp.eq.s32.totalorder %s24, 0
      %p98 = por %p96, %p97
      %p99 = scmp.ne.s32.totalorder %s88, %s91
      %p100 = scmp.eq.s32.totalorder %s29, 3
      %p101 = por %p99, %p100
      %p102 = scmp.ne.s32.totalorder %s91, %s92
      %p103 = scmp.eq.s32.totalorder %s29, 0
      %p104 = por %p102, %p103
      %p105 = scmp.ne.s32.totalorder %s91, %s92
      %p106 = scmp.eq.s32.totalorder %s30, 3
      %p107 = por %p105, %p106
      %p109 = scmp.ne.s32.totalorder %s92, %s108
      %p110 = scmp.eq.s32.totalorder %s30, 0
      %p111 = por %p109, %p110
      %s113 = sadd.s32 %s112, 1
      %p116 = scmp.eq.s32.totalorder %s24, 3
      %p117 = scmp.ne.s32.totalorder %s112, %s114
      %p118 = scmp.eq.s32.totalorder %s24, 0
      %p119 = por %p117, %p118
      %p120 = scmp.ne.s32.totalorder %s112, %s114
      %p121 = scmp.eq.s32.totalorder %s29, 3
      %p122 = por %p120, %p121
      %p123 = scmp.ne.s32.totalorder %s114, %s115
      %p124 = scmp.eq.s32.totalorder %s29, 0
      %p125 = por %p123, %p124
      %p126 = scmp.ne.s32.totalorder %s114, %s115
      %p127 = scmp.eq.s32.totalorder %s30, 3
      %p128 = por %p126, %p127
      %p130 = scmp.ne.s32.totalorder %s115, %s129
      %p131 = scmp.eq.s32.totalorder %s30, 0
      %p132 = por %p130, %p131
      %s134 = sadd.s32 %s133, 1
      %p137 = scmp.eq.s32.totalorder %s24, 3
      %p138 = scmp.ne.s32.totalorder %s133, %s135
      %p139 = scmp.eq.s32.totalorder %s24, 0
      %p140 = por %p138, %p139
      %p141 = scmp.ne.s32.totalorder %s133, %s135
      %p142 = scmp.eq.s32.totalorder %s29, 3
      %p143 = por %p141, %p142
      %p144 = scmp.ne.s32.totalorder %s135, %s136
      %p145 = scmp.eq.s32.totalorder %s29, 0
      %p146 = por %p144, %p145
      %p147 = scmp.ne.s32.totalorder %s135, %s136
      %p148 = scmp.eq.s32.totalorder %s30, 3
      %p149 = por %p147, %p148
      %p151 = scmp.ne.s32.totalorder %s136, %s150
      %p152 = scmp.eq.s32.totalorder %s30, 0
      %p153 = por %p151, %p152
      %s154 = ssub.s32 %s31, %s43
      %s155 = ssub.s32 %s32, %s39
      %s156 = sor.u32 %s154, %s155
      %p157 = scmp.eq.s32.totalorder %s156, 0
      %s159 = sadd.s32 %s158, 1
      %s160 = scalar_select %p157, %s158, %s159
      %p163 = pneg %p157
      %p164 = scmp.eq.s32.totalorder %s24, 3
      %p165 = por %p163, %p164
      %p166 = scmp.ne.s32.totalorder %s158, %s161
      %p167 = scmp.eq.s32.totalorder %s24, 0
      %p168 = por %p166, %p167
      %p169 = scmp.ne.s32.totalorder %s158, %s161
      %p170 = scmp.eq.s32.totalorder %s29, 3
      %p171 = por %p169, %p170
      %p172 = scmp.ne.s32.totalorder %s161, %s162
      %p173 = scmp.eq.s32.totalorder %s29, 0
      %p174 = por %p172, %p173
      %p175 = scmp.ne.s32.totalorder %s161, %s162
      %p176 = scmp.eq.s32.totalorder %s30, 3
      %p177 = por %p175, %p176
      %p179 = scmp.ne.s32.totalorder %s162, %s178
      %p180 = scmp.eq.s32.totalorder %s30, 0
      %p181 = por %p179, %p180
      %p182 = scmp.le.s32.totalorder 1, %s24
      %p183 = scmp.lt.s32.totalorder %s24, 5
      %p184 = pnand %p182, %p183
      %p185 = pneg %p184
      // Predicated region
      $region9: #{tpu_custom_call.1} parent=5 // pred_check
        _
      $region10: #{tpu_custom_call.1} parent=5 // pred_check_branch
        %187 = sbr.rel (%p184) target = $region12
      $region11: #{tpu_custom_call.1} parent=5 // pred_region
        %s188 = ssub.s32 %s24, 1
        // Predicated region
        $region13: #{tpu_custom_call.1} parent=11 // pred_check
          %p189 = pneg %p57
        $region14: #{tpu_custom_call.1} parent=11 // pred_check_branch
          %191 = sbr.rel (%p189) target = $region16
        $region15: #{tpu_custom_call.1} parent=11 // pred_region
          %s193 = ssub.s32 2048, 2048
          %194 = vsyncadd [#allocation7], %s193
          %s195 = sshll.u32 [#allocation6], 4
          %s196 = int_to_ptr.vmem [resolvable:$true] %s195
          %201 = dma.hbm_to_vmem [thread:$0]  %s2, 2048, %s196, [#allocation7], 128, 128, 8
        $region16: #{tpu_custom_call.1} parent=11 // pred_fallthru
          _
        // Predicated region
        $region17: #{tpu_custom_call.1} parent=11 // pred_check
          %p202 = pneg %p78
        $region18: #{tpu_custom_call.1} parent=11 // pred_check_branch
          %204 = sbr.rel (%p202) target = $region20
        $region19: #{tpu_custom_call.1} parent=11 // pred_region
          _
        $region20: #{tpu_custom_call.1} parent=11 // pred_fallthru
          _
        // Predicated region
        $region21: #{tpu_custom_call.1} parent=11 // pred_check
          %p205 = pneg %p125
        $region22: #{tpu_custom_call.1} parent=11 // pred_check_branch
          %207 = sbr.rel (%p205) target = $region24
        $region23: #{tpu_custom_call.1} parent=11 // pred_region
          _
        $region24: #{tpu_custom_call.1} parent=11 // pred_fallthru
          _
        // Predicated region
        $region25: #{tpu_custom_call.1} parent=11 // pred_check
          %p208 = pneg %p146
        $region26: #{tpu_custom_call.1} parent=11 // pred_check_branch
          %210 = sbr.rel (%p208) target = $region28
        $region27: #{tpu_custom_call.1} parent=11 // pred_region
          _
        $region28: #{tpu_custom_call.1} parent=11 // pred_fallthru
          _
      $region12: #{tpu_custom_call.1} parent=5 // pred_fallthru
        _
      %p211 = scmp.lt.s32.totalorder %s24, 4
      // Predicated region
      $region29: #{tpu_custom_call.1} parent=5 // pred_check
        %p212 = pneg %p211
      $region30: #{tpu_custom_call.1} parent=5 // pred_check_branch
        %214 = sbr.rel (%p212) target = $region32
      $region31: #{tpu_custom_call.1} parent=5 // pred_region
        // Predicated region
        $region33: #{tpu_custom_call.1} parent=31 // pred_check
          %p215 = pneg %p98
        $region34: #{tpu_custom_call.1} parent=31 // pred_check_branch
          %217 = sbr.rel (%p215) target = $region36
        $region35: #{tpu_custom_call.1} parent=31 // pred_region
          %s218 = sand.u32 %s88, 1
          %s219 = scalar_lea.sflag [#allocation10], %s218
          %s220 = sand.u32 %s88, 1
          %s221 = smul.addr %s220, 64
          %s222 = scalar_lea.vmem [#allocation9], %s221
          %s223 = smul.u32 8, %s32
          %s225 = ssub.s32 1024, 1024
          %226 = vsyncadd %s219, %s225
          %s227 = smul.addr %s223, 128
          %s228 = scalar_lea.hbm %s4, %s227
          %s229 = sshll.u32 %s222, 4
          %s230 = int_to_ptr.vmem [resolvable:$true] %s229
          %235 = dma.hbm_to_vmem [thread:$0]  %s228, 1024, %s230, %s219, 128, 128, 8
        $region36: #{tpu_custom_call.1} parent=31 // pred_fallthru
          _
      $region32: #{tpu_custom_call.1} parent=5 // pred_fallthru
        _
      %p236 = scmp.le.s32.totalorder 1, %s24
      %p237 = scmp.lt.s32.totalorder %s24, 5
      %p238 = pnand %p236, %p237
      %p239 = pneg %p238
      // Predicated region
      $region37: #{tpu_custom_call.1} parent=5 // pred_check
        _
      $region38: #{tpu_custom_call.1} parent=5 // pred_check_branch
        %241 = sbr.rel (%p238) target = $region40
      $region39: #{tpu_custom_call.1} parent=5 // pred_region
        %s242 = ssub.s32 %s24, 1
        // Predicated region
        $region41: #{tpu_custom_call.1} parent=39 // pred_check
          %p243 = pneg %p57
        $region42: #{tpu_custom_call.1} parent=39 // pred_check_branch
          %245 = sbr.rel (%p243) target = $region44
        $region43: #{tpu_custom_call.1} parent=39 // pred_region
          %246 = dma.done [#allocation7], 2048
        $region44: #{tpu_custom_call.1} parent=39 // pred_fallthru
          _
        %s247 = sand.u32 %s91, 1
        %s248 = scalar_lea.sflag [#allocation10], %s247
        %s249 = sand.u32 %s91, 1
        %s250 = smul.addr %s249, 64
        %s251 = scalar_lea.vmem [#allocation9], %s250
        // Predicated region
        $region45: #{tpu_custom_call.1} parent=39 // pred_check
          %p252 = pneg %p104
        $region46: #{tpu_custom_call.1} parent=39 // pred_check_branch
          %254 = sbr.rel (%p252) target = $region48
        $region47: #{tpu_custom_call.1} parent=39 // pred_region
          %255 = dma.done %s248, 1024
        $region48: #{tpu_custom_call.1} parent=39 // pred_fallthru
          _
        %p256 = pneg %p57
        %p257 = pneg %p54
        %p258 = pneg %p78
        %p259 = pneg %p75
        %s260 = sand.u32 %s91, 1
        %s261 = scalar_lea.sflag [#allocation10], %s260
        %s262 = sand.u32 %s91, 1
        %s263 = smul.addr %s262, 64
        %s264 = scalar_lea.vmem [#allocation9], %s263
        %p265 = pneg %p104
        %p266 = pneg %p101
        %p267 = pneg %p125
        %p268 = pneg %p122
        %p269 = pneg %p146
        %p270 = pneg %p143
        %p271 = pneg %p174
        %p272 = pneg %p171
        %s273 = sand.u32 %s161, 1
        %s274 = scalar_lea.sflag [#allocation8], %s273
        %s275 = sand.u32 %s161, 1
        %s276 = smul.addr %s275, 64
        %s277 = scalar_lea.vmem [#allocation11], %s276
        %s278 = smul.u32 8, %s34
        %s279 = smul.u32 8, %s34
        %s280 = smul.u32 %s34, 64
        loop: start=0, step=1, limit=64
        $region49: #{tpu_custom_call.1} parent=39 // loop_pre_header
          _
        $region50: #{tpu_custom_call.1} parent=39 // loop_header
          %s282 = sphi 0, %s286
          %p283 = scmp.ge.s32.totalorder %s282, 64
        $region51: #{tpu_custom_call.1} parent=39 // loop_header_branch
          %285 = sbr.rel (%p283) target = $region55
        $region52: #{tpu_custom_call.1} parent=39 // loop_body
          %s287 = sadd.s32 %s280, %s282
          %s288 = sshra.s32 %s287, 7
          %s289 = sand.u32 %s287, 127
          %s290 = sadd.s32 %s288, %s33
          %s291 = smul.u32 %s290, 128
          %s292 = sshra.s32 %s287, 7
          %s293 = sand.u32 %s287, 127
          %s294 = sadd.s32 %s291, %s293
          %s295 = sld [smem:[#allocation5 + %s294]]
          %s296 = smul.addr %s295, 16
          %s297 = scalar_lea.hbm %s1, %s296
          %s298 = scalar_lea.vmem [#allocation2], %s282
          // Predicated region
          $region56: #{tpu_custom_call.1} parent=52 // pred_check
            _
          $region57: #{tpu_custom_call.1} parent=52 // pred_check_branch
            %300 = sbr.rel target = $region59
          $region58: #{tpu_custom_call.1} parent=52 // pred_region
            %301 = sst [smem:[#allocation14]] [#allocation13]
            %302 = sst [smem:[#allocation15]] [#allocation12]
          $region59: #{tpu_custom_call.1} parent=52 // pred_fallthru
            _
          %304 = shalt.err (0)
          %s306 = sshll.u32 %s298, 4
          %s307 = int_to_ptr.vmem [resolvable:$true] %s306
          %309 = dma.hbm_to_vmem [thread:$0]  %s297, 16, %s307, [#allocation3]
        $region53: #{tpu_custom_call.1} parent=39 // loop_footer
          %s286 = sadd.s32 1, %s282
        $region54: #{tpu_custom_call.1} parent=39 // loop_footer_branch
          %281 = sbr.rel target = $region50
        $region55: #{tpu_custom_call.1} parent=39 // loop_exit
          _
        loop: start=0, step=1, limit=64
        $region60: #{tpu_custom_call.1} parent=39 // loop_pre_header
          _
        $region61: #{tpu_custom_call.1} parent=39 // loop_header
          %s311 = sphi 0, %s315
          %p312 = scmp.ge.s32.totalorder %s311, 64
        $region62: #{tpu_custom_call.1} parent=39 // loop_header_branch
          %314 = sbr.rel (%p312) target = $region66
        $region63: #{tpu_custom_call.1} parent=39 // loop_body
          %s316 = smul.u32 1, 1
          %s317 = sshll.u32 %s316, 4
          %318 = dma.done [#allocation3], %s317
        $region64: #{tpu_custom_call.1} parent=39 // loop_footer
          %s315 = sadd.s32 1, %s311
        $region65: #{tpu_custom_call.1} parent=39 // loop_footer_branch
          %310 = sbr.rel target = $region61
        $region66: #{tpu_custom_call.1} parent=39 // loop_exit
          _
        %v319 = vld [vmem:[#allocation2] sm:$0xff]
        %v320 = vld [vmem:[#allocation2 + $0x8] sm:$0xff]
        %v321 = vld [vmem:[#allocation2 + $0x10] sm:$0xff]
        %v322 = vld [vmem:[#allocation2 + $0x18] sm:$0xff]
        %v323 = vld [vmem:[#allocation2 + $0x20] sm:$0xff]
        %v324 = vld [vmem:[#allocation2 + $0x28] sm:$0xff]
        %v325 = vld [vmem:[#allocation2 + $0x30] sm:$0xff]
        %v326 = vld [vmem:[#allocation2 + $0x38] sm:$0xff]
        %v327 = vld [vmem:[#allocation6] sm:$0xff]
        %v328 = vld [vmem:[#allocation6 + $0x8] sm:$0xff]
        %v329 = vld [vmem:[#allocation6 + $0x10] sm:$0xff]
        %v330 = vld [vmem:[#allocation6 + $0x18] sm:$0xff]
        %v331 = vld [vmem:[#allocation6 + $0x20] sm:$0xff]
        %v332 = vld [vmem:[#allocation6 + $0x28] sm:$0xff]
        %v333 = vld [vmem:[#allocation6 + $0x30] sm:$0xff]
        %v334 = vld [vmem:[#allocation6 + $0x38] sm:$0xff]
        %v335 = vld [vmem:[#allocation6 + $0x40] sm:$0xff]
        %v336 = vld [vmem:[#allocation6 + $0x48] sm:$0xff]
        %v337 = vld [vmem:[#allocation6 + $0x50] sm:$0xff]
        %v338 = vld [vmem:[#allocation6 + $0x58] sm:$0xff]
        %v339 = vld [vmem:[#allocation6 + $0x60] sm:$0xff]
        %v340 = vld [vmem:[#allocation6 + $0x68] sm:$0xff]
        %v341 = vld [vmem:[#allocation6 + $0x70] sm:$0xff]
        %v342 = vld [vmem:[#allocation6 + $0x78] sm:$0xff]
        %v343 = vld [vmem:[%s3] sm:$0x1]
        %v345 = vlaneseq
        %v346 = vshrl.u32 %v345, 7
        %v347 = vsub.s32 0, %v346
        %v348 = vrot.slane %v343, %v347
        %350 = vmatprep.subr.mxu0 0.0
        %351 = vmatpush1.msra.mxu0 %v327
        %352 = vmatprep.subr.mxu0 0.0
        %353 = vmatpush1.msra.mxu0 %v328
        %354 = vmatprep.subr.mxu0 0.0
        %355 = vmatpush1.msra.mxu0 %v329
        %356 = vmatprep.subr.mxu0 0.0
        %357 = vmatpush1.msra.mxu0 %v330
        %358 = vmatprep.subr.mxu0 0.0
        %359 = vmatpush1.msra.mxu0 %v331
        %360 = vmatprep.subr.mxu0 0.0
        %361 = vmatpush1.msra.mxu0 %v332
        %362 = vmatprep.subr.mxu0 0.0
        %363 = vmatpush1.msra.mxu0 %v333
        %364 = vmatprep.subr.mxu0 0.0
        %365 = vmatpush1.msra.mxu0 %v334
        %366 = vmatprep.subr.mxu0 0.0
        %367 = vmatpush1.msra.mxu0 %v335
        %368 = vmatprep.subr.mxu0 0.0
        %369 = vmatpush1.msra.mxu0 %v336
        %370 = vmatprep.subr.mxu0 0.0
        %371 = vmatpush1.msra.mxu0 %v337
        %372 = vmatprep.subr.mxu0 0.0
        %373 = vmatpush1.msra.mxu0 %v338
        %374 = vmatprep.subr.mxu0 0.0
        %375 = vmatpush1.msra.mxu0 %v339
        %376 = vmatprep.subr.mxu0 0.0
        %377 = vmatpush1.msra.mxu0 %v340
        %378 = vmatprep.subr.mxu0 0.0
        %379 = vmatpush1.msra.mxu0 %v341
        %380 = vmatprep.subr.mxu0 0.0
        %381 = vmatpush1.msra.mxu0 %v342
        %382 = vmatprep.subr.mxu0 0.0
        %383 = vmatpush1.msra.mxu0 0.0
        %384 = vmatprep.subr.mxu0 0.0
        %385 = vmatpush1.msra.mxu0 0.0
        %386 = vmatprep.subr.mxu0 0.0
        %387 = vmatpush1.msra.mxu0 0.0
        %388 = vmatprep.subr.mxu0 0.0
        %389 = vmatpush1.msra.mxu0 0.0
        %390 = vmatprep.subr.mxu0 0.0
        %391 = vmatpush1.msra.mxu0 0.0
        %392 = vmatprep.subr.mxu0 0.0
        %393 = vmatpush1.msra.mxu0 0.0
        %394 = vmatprep.subr.mxu0 0.0
        %395 = vmatpush1.msra.mxu0 0.0
        %396 = vmatprep.subr.mxu0 0.0
        %397 = vmatpush1.msra.mxu0 0.0
        %398 = vmatprep.subr.mxu0 0.0
        %399 = vmatpush1.msra.mxu0 0.0
        %400 = vmatprep.subr.mxu0 0.0
        %401 = vmatpush1.msra.mxu0 0.0
        %402 = vmatprep.subr.mxu0 0.0
        %403 = vmatpush1.msra.mxu0 0.0
        %404 = vmatprep.subr.mxu0 0.0
        %405 = vmatpush1.msra.mxu0 0.0
        %406 = vmatprep.subr.mxu0 0.0
        %407 = vmatpush1.msra.mxu0 0.0
        %408 = vmatprep.subr.mxu0 0.0
        %409 = vmatpush1.msra.mxu0 0.0
        %410 = vmatprep.subr.mxu0 0.0
        %411 = vmatpush1.msra.mxu0 0.0
        %412 = vmatprep.subr.mxu0 0.0
        %413 = vmatpush1.msra.mxu0 0.0
        %414 = vmatprep.mubr.f32.mxu0 0.0
        %415 = vmatmul.mubr.f32.gmra.mrb[0].mxu0 %v319
        %v416 = vpop.f32.mrb[0].mxu0
        %v417 = vadd.f32 %v348, %v416
        %v418 = vpop.f32.mrb[0].mxu0
        %419 = vmatprep.mubr.f32.mxu0 0.0
        %420 = vmatmul.mubr.f32.gmra.mrb[0].mxu0 %v320
        %v421 = vpop.f32.mrb[0].mxu0
        %v422 = vadd.f32 %v348, %v421
        %v423 = vpop.f32.mrb[0].mxu0
        %424 = vmatprep.mubr.f32.mxu0 0.0
        %425 = vmatmul.mubr.f32.gmra.mrb[0].mxu0 %v321
        %v426 = vpop.f32.mrb[0].mxu0
        %v427 = vadd.f32 %v348, %v426
        %v428 = vpop.f32.mrb[0].mxu0
        %429 = vmatprep.mubr.f32.mxu0 0.0
        %430 = vmatmul.mubr.f32.gmra.mrb[0].mxu0 %v322
        %v431 = vpop.f32.mrb[0].mxu0
        %v432 = vadd.f32 %v348, %v431
        %v433 = vpop.f32.mrb[0].mxu0
        %434 = vmatprep.mubr.f32.mxu0 0.0
        %435 = vmatmul.mubr.f32.gmra.mrb[0].mxu0 %v323
        %v436 = vpop.f32.mrb[0].mxu0
        %v437 = vadd.f32 %v348, %v436
        %v438 = vpop.f32.mrb[0].mxu0
        %439 = vmatprep.mubr.f32.mxu0 0.0
        %440 = vmatmul.mubr.f32.gmra.mrb[0].mxu0 %v324
        %v441 = vpop.f32.mrb[0].mxu0
        %v442 = vadd.f32 %v348, %v441
        %v443 = vpop.f32.mrb[0].mxu0
        %444 = vmatprep.mubr.f32.mxu0 0.0
        %445 = vmatmul.mubr.f32.gmra.mrb[0].mxu0 %v325
        %v446 = vpop.f32.mrb[0].mxu0
        %v447 = vadd.f32 %v348, %v446
        %v448 = vpop.f32.mrb[0].mxu0
        %449 = vmatprep.mubr.f32.mxu0 0.0
        %450 = vmatmul.mubr.f32.gmra.mrb[0].mxu0 %v326
        %v451 = vpop.f32.mrb[0].mxu0
        %v452 = vadd.f32 %v348, %v451
        %v453 = vpop.f32.mrb[0].mxu0
        %454 = vdwg.mxu0
        %v455 = vmul.f32 %v417, 0.5
        %v456 = vmul.f32 %v422, 0.5
        %v457 = vmul.f32 %v427, 0.5
        %v458 = vmul.f32 %v432, 0.5
        %v459 = vmul.f32 %v437, 0.5
        %v460 = vmul.f32 %v442, 0.5
        %v461 = vmul.f32 %v447, 0.5
        %v462 = vmul.f32 %v452, 0.5
        %v463 = vmul.f32 %v417, 0.70710677
        %v464 = vmul.f32 %v422, 0.70710677
        %v465 = vmul.f32 %v427, 0.70710677
        %v466 = vmul.f32 %v432, 0.70710677
        %v467 = vmul.f32 %v437, 0.70710677
        %v468 = vmul.f32 %v442, 0.70710677
        %v469 = vmul.f32 %v447, 0.70710677
        %v470 = vmul.f32 %v452, 0.70710677
        %v471 = verf.f32.pop %v463
        %v472 = verf.f32.pop %v464
        %v473 = verf.f32.pop %v465
        %v474 = verf.f32.pop %v466
        %v475 = verf.f32.pop %v467
        %v476 = verf.f32.pop %v468
        %v477 = verf.f32.pop %v469
        %v478 = verf.f32.pop %v470
        %v479 = vadd.f32 %v471, 1.0
        %v480 = vadd.f32 %v472, 1.0
        %v481 = vadd.f32 %v473, 1.0
        %v482 = vadd.f32 %v474, 1.0
        %v483 = vadd.f32 %v475, 1.0
        %v484 = vadd.f32 %v476, 1.0
        %v485 = vadd.f32 %v477, 1.0
        %v486 = vadd.f32 %v478, 1.0
        %v487 = vmul.f32 %v455, %v479
        %v488 = vmul.f32 %v456, %v480
        %v489 = vmul.f32 %v457, %v481
        %v490 = vmul.f32 %v458, %v482
        %v491 = vmul.f32 %v459, %v483
        %v492 = vmul.f32 %v460, %v484
        %v493 = vmul.f32 %v461, %v485
        %v494 = vmul.f32 %v462, %v486
        %v495 = vld [vmem:[%s251] sm:$0xff]
        %v496 = vld [vmem:[%s251 + $0x8] sm:$0xff]
        %v497 = vld [vmem:[%s251 + $0x10] sm:$0xff]
        %v498 = vld [vmem:[%s251 + $0x18] sm:$0xff]
        %v499 = vld [vmem:[%s251 + $0x20] sm:$0xff]
        %v500 = vld [vmem:[%s251 + $0x28] sm:$0xff]
        %v501 = vld [vmem:[%s251 + $0x30] sm:$0xff]
        %v502 = vld [vmem:[%s251 + $0x38] sm:$0xff]
        %v503 = vadd.f32 %v487, %v495
        %v504 = vadd.f32 %v488, %v496
        %v505 = vadd.f32 %v489, %v497
        %v506 = vadd.f32 %v490, %v498
        %v507 = vadd.f32 %v491, %v499
        %v508 = vadd.f32 %v492, %v500
        %v509 = vadd.f32 %v493, %v501
        %v510 = vadd.f32 %v494, %v502
        %511 = vadd.xlane.f32.xlu0 %v503
        %v512 = vpop.xlane.xlu0 %511
        %513 = vadd.xlane.f32.xlu0 %v504
        %v514 = vpop.xlane.xlu0 %513
        %515 = vadd.xlane.f32.xlu0 %v505
        %v516 = vpop.xlane.xlu0 %515
        %517 = vadd.xlane.f32.xlu0 %v506
        %v518 = vpop.xlane.xlu0 %517
        %519 = vadd.xlane.f32.xlu0 %v507
        %v520 = vpop.xlane.xlu0 %519
        %521 = vadd.xlane.f32.xlu0 %v508
        %v522 = vpop.xlane.xlu0 %521
        %523 = vadd.xlane.f32.xlu0 %v509
        %v524 = vpop.xlane.xlu0 %523
        %525 = vadd.xlane.f32.xlu0 %v510
        %v526 = vpop.xlane.xlu0 %525
        %v527 = vmul.f32 %v503, %v503
        %v528 = vmul.f32 %v504, %v504
        %v529 = vmul.f32 %v505, %v505
        %v530 = vmul.f32 %v506, %v506
        %v531 = vmul.f32 %v507, %v507
        %v532 = vmul.f32 %v508, %v508
        %v533 = vmul.f32 %v509, %v509
        %v534 = vmul.f32 %v510, %v510
        %535 = vadd.xlane.f32.xlu0 %v527
        %v536 = vpop.xlane.xlu0 %535
        %537 = vadd.xlane.f32.xlu0 %v528
        %v538 = vpop.xlane.xlu0 %537
        %539 = vadd.xlane.f32.xlu0 %v529
        %v540 = vpop.xlane.xlu0 %539
        %541 = vadd.xlane.f32.xlu0 %v530
        %v542 = vpop.xlane.xlu0 %541
        %543 = vadd.xlane.f32.xlu0 %v531
        %v544 = vpop.xlane.xlu0 %543
        %545 = vadd.xlane.f32.xlu0 %v532
        %v546 = vpop.xlane.xlu0 %545
        %547 = vadd.xlane.f32.xlu0 %v533
        %v548 = vpop.xlane.xlu0 %547
        %549 = vadd.xlane.f32.xlu0 %v534
        %v550 = vpop.xlane.xlu0 %549
        %v551 = vmul.f32 %v512, 0.0078125
        %v552 = vmul.f32 %v514, 0.0078125
        %v553 = vmul.f32 %v516, 0.0078125
        %v554 = vmul.f32 %v518, 0.0078125
        %v555 = vmul.f32 %v520, 0.0078125
        %v556 = vmul.f32 %v522, 0.0078125
        %v557 = vmul.f32 %v524, 0.0078125
        %v558 = vmul.f32 %v526, 0.0078125
        %v559 = vmul.f32 %v536, 0.0078125
        %v560 = vmul.f32 %v538, 0.0078125
        %v561 = vmul.f32 %v540, 0.0078125
        %v562 = vmul.f32 %v542, 0.0078125
        %v563 = vmul.f32 %v544, 0.0078125
        %v564 = vmul.f32 %v546, 0.0078125
        %v565 = vmul.f32 %v548, 0.0078125
        %v566 = vmul.f32 %v550, 0.0078125
        %v567 = vmul.f32 %v551, %v551
        %v568 = vmul.f32 %v552, %v552
        %v569 = vmul.f32 %v553, %v553
        %v570 = vmul.f32 %v554, %v554
        %v571 = vmul.f32 %v555, %v555
        %v572 = vmul.f32 %v556, %v556
        %v573 = vmul.f32 %v557, %v557
        %v574 = vmul.f32 %v558, %v558
        %v575 = vsub.f32 %v559, %v567
        %v576 = vsub.f32 %v560, %v568
        %v577 = vsub.f32 %v561, %v569
        %v578 = vsub.f32 %v562, %v570
        %v579 = vsub.f32 %v563, %v571
        %v580 = vsub.f32 %v564, %v572
        %v581 = vsub.f32 %v565, %v573
        %v582 = vsub.f32 %v566, %v574
        %v583 = vsub.f32 %v503, %v551
        %v584 = vsub.f32 %v504, %v552
        %v585 = vsub.f32 %v505, %v553
        %v586 = vsub.f32 %v506, %v554
        %v587 = vsub.f32 %v507, %v555
        %v588 = vsub.f32 %v508, %v556
        %v589 = vsub.f32 %v509, %v557
        %v590 = vsub.f32 %v510, %v558
        %v591 = vadd.f32 %v575, 1e-12
        %v592 = vadd.f32 %v576, 1e-12
        %v593 = vadd.f32 %v577, 1e-12
        %v594 = vadd.f32 %v578, 1e-12
        %v595 = vadd.f32 %v579, 1e-12
        %v596 = vadd.f32 %v580, 1e-12
        %v597 = vadd.f32 %v581, 1e-12
        %v598 = vadd.f32 %v582, 1e-12
        %v599 = vrsqrt.pop %v591
        %v600 = vrsqrt.pop %v592
        %v601 = vrsqrt.pop %v593
        %v602 = vrsqrt.pop %v594
        %v603 = vrsqrt.pop %v595
        %v604 = vrsqrt.pop %v596
        %v605 = vrsqrt.pop %v597
        %v606 = vrsqrt.pop %v598
        %v607 = vmul.f32 %v583, %v599
        %v608 = vmul.f32 %v584, %v600
        %v609 = vmul.f32 %v585, %v601
        %v610 = vmul.f32 %v586, %v602
        %v611 = vmul.f32 %v587, %v603
        %v612 = vmul.f32 %v588, %v604
        %v613 = vmul.f32 %v589, %v605
        %v614 = vmul.f32 %v590, %v606
        %v615 = vld [vmem:[%s5] sm:$0x1]
        %v617 = vlaneseq
        %v618 = vshrl.u32 %v617, 7
        %v619 = vsub.s32 0, %v618
        %v620 = vrot.slane %v615, %v619
        %v622 = vmul.f32 %v607, %v620
        %v623 = vmul.f32 %v608, %v620
        %v624 = vmul.f32 %v609, %v620
        %v625 = vmul.f32 %v610, %v620
        %v626 = vmul.f32 %v611, %v620
        %v627 = vmul.f32 %v612, %v620
        %v628 = vmul.f32 %v613, %v620
        %v629 = vmul.f32 %v614, %v620
        %v630 = vld [vmem:[%s6] sm:$0x1]
        %v632 = vlaneseq
        %v633 = vshrl.u32 %v632, 7
        %v634 = vsub.s32 0, %v633
        %v635 = vrot.slane %v630, %v634
        %v637 = vadd.f32 %v622, %v635
        %v638 = vadd.f32 %v623, %v635
        %v639 = vadd.f32 %v624, %v635
        %v640 = vadd.f32 %v625, %v635
        %v641 = vadd.f32 %v626, %v635
        %v642 = vadd.f32 %v627, %v635
        %v643 = vadd.f32 %v628, %v635
        %v644 = vadd.f32 %v629, %v635
        %645 = vst [vmem:[%s277] sm:$0xff] %v637
        %646 = vst [vmem:[%s277 + $0x8] sm:$0xff] %v638
        %647 = vst [vmem:[%s277 + $0x10] sm:$0xff] %v639
        %648 = vst [vmem:[%s277 + $0x18] sm:$0xff] %v640
        %649 = vst [vmem:[%s277 + $0x20] sm:$0xff] %v641
        %650 = vst [vmem:[%s277 + $0x28] sm:$0xff] %v642
        %651 = vst [vmem:[%s277 + $0x30] sm:$0xff] %v643
        %652 = vst [vmem:[%s277 + $0x38] sm:$0xff] %v644
        %s653 = sand.u32 %s161, 1
        %s654 = scalar_lea.sflag [#allocation8], %s653
        %s655 = sand.u32 %s161, 1
        %s656 = smul.addr %s655, 64
        %s657 = scalar_lea.vmem [#allocation11], %s656
        // Predicated region
        $region67: #{tpu_custom_call.1} parent=39 // pred_check
          %p658 = pneg %p171
        $region68: #{tpu_custom_call.1} parent=39 // pred_check_branch
          %660 = sbr.rel (%p658) target = $region70
        $region69: #{tpu_custom_call.1} parent=39 // pred_region
          %s661 = smul.u32 8, %s34
          %s663 = ssub.s32 1024, 1024
          %664 = vsyncadd %s654, %s663
          %s665 = smul.addr %s33, 16
          %s666 = sadd.s32 %s661, %s665
          %s667 = smul.addr %s666, 128
          %s668 = scalar_lea.hbm %s7, %s667
          %s669 = sshll.u32 %s657, 4
          %s670 = int_to_ptr.vmem [resolvable:$true] %s669
          %675 = dma.vmem_to_hbm [thread:$0]  %s670, 1024, %s668, %s654, 128, 128, 8
        $region70: #{tpu_custom_call.1} parent=39 // pred_fallthru
          _
      $region40: #{tpu_custom_call.1} parent=5 // pred_fallthru
        _
      %p676 = scmp.le.s32.totalorder 2, %s24
      // Predicated region
      $region71: #{tpu_custom_call.1} parent=5 // pred_check
        %p677 = pneg %p676
      $region72: #{tpu_custom_call.1} parent=5 // pred_check_branch
        %679 = sbr.rel (%p677) target = $region74
      $region73: #{tpu_custom_call.1} parent=5 // pred_region
        %s680 = ssub.s32 %s24, 2
        // Predicated region
        $region75: #{tpu_custom_call.1} parent=73 // pred_check
          %p681 = pneg %p177
        $region76: #{tpu_custom_call.1} parent=73 // pred_check_branch
          %683 = sbr.rel (%p681) target = $region78
        $region77: #{tpu_custom_call.1} parent=73 // pred_region
          %s684 = sand.u32 %s162, 1
          %s685 = scalar_lea.sflag [#allocation8], %s684
          %s686 = sand.u32 %s162, 1
          %s687 = smul.addr %s686, 64
          %s688 = scalar_lea.vmem [#allocation11], %s687
          %689 = dma.done %s685, 1024
        $region78: #{tpu_custom_call.1} parent=73 // pred_fallthru
          _
      $region74: #{tpu_custom_call.1} parent=5 // pred_fallthru
        _
    $region6: #{tpu_custom_call.1} parent=1 // loop_footer
      %s28 = sadd.s32 1, %s24
    $region7: #{tpu_custom_call.1} parent=1 // loop_footer_branch
      %23 = sbr.rel target = $region3
    $region8: #{tpu_custom_call.1} parent=1 // loop_exit
      _
    %690 = vsyncpa [#allocation7], 1
    %s691 = scalar_lea.sflag [#allocation7], 1
    %692 = vsyncpa %s691, 1
    %693 = vsyncpa [#allocation10], 1
    %s694 = scalar_lea.sflag [#allocation10], 1
    %695 = vsyncpa %s694, 1
    %696 = vsyncpa [#allocation8], 1
    %s697 = scalar_lea.sflag [#allocation8], 1
    %698 = vsyncpa %s697, 1
  %699 = vsyncmov [#allocation3]
  %s700 = vpop.sfrf %699
  %p701 = scmp.eq.s32.totalorder %s700, 0
  %p702 = pneg %p701
  %704 = shalt.err (%p702)

</llo_original>
